<compile_context>
chip_gen: v5e
topology: v5e:2x2
jax: 0.10.0
libtpu: 0.0.40
codegen_flags: <defaults>
</compile_context>

<pallas_src>
import jax
import jax.numpy as jnp
from jax.experimental import pallas as pl
from jax.experimental.pallas import tpu as pltpu


def _round_up(x, m):
    return (x + m - 1) // m * m


def mlp_kernel(x_ref, w1_ref, b1_ref, w2_ref, b2_ref, o_ref):
    # fc1: x @ W1 + b1  (zero-padded K columns contribute nothing)
    h = jnp.dot(x_ref[...], w1_ref[...], preferred_element_type=jnp.float32)
    h = h + b1_ref[...]
    # fc2: h @ W2 + b2  (no activation between, matching the PyTorch module).
    # h stays in f32 — no truncating cast before the second matmul.
    out = jnp.dot(h, w2_ref[...], preferred_element_type=jnp.float32)
    out = out + b2_ref[...]
    o_ref[...] = out.astype(o_ref.dtype)


def custom_model_forward(x, w1, b1, w2, b2, *, row_tile=None):
    """out = (x @ W1 + b1) @ W2 + b2.

    x : (B, image_size)
    w1: (image_size, hidden_1)   b1: (1, hidden_1)
    w2: (hidden_1, hidden_2)     b2: (1, hidden_2)

    row_tile=None -> whole batch in one block (grid=(1,)), best for small B.
    For large B pass row_tile=128 (v5e) or 256 (v6e/v7x); must divide B
    (and on v7x prefer B//row_tile even so both TensorCores get work).
    """
    B, image_size = x.shape
    hidden_1 = w1.shape[1]
    hidden_2 = w2.shape[1]

    # Lane-dense padding: pad contraction (K) and output (N) dims to 128 so
    # x tiles, fc1 contraction, and output stores use full, unmasked vregs.
    K = _round_up(image_size, 128)
    H1 = _round_up(hidden_1, 128)
    N = _round_up(hidden_2, 128)

    xp = jnp.pad(x, ((0, 0), (0, K - image_size)))
    w1p = jnp.pad(w1, ((0, K - image_size), (0, H1 - hidden_1)))
    b1p = jnp.pad(b1, ((0, 0), (0, H1 - hidden_1)))
    w2p = jnp.pad(w2, ((0, H1 - hidden_1), (0, N - hidden_2)))
    b2p = jnp.pad(b2, ((0, 0), (0, N - hidden_2)))

    if row_tile is None:
        tm = B                      # single block -> grid=(1,)
    else:
        tm = row_tile
        assert B % tm == 0, "batch must be divisible by row_tile"
    grid = (B // tm,)

    out_padded = pl.pallas_call(
        mlp_kernel,
        out_shape=jax.ShapeDtypeStruct((B, N), x.dtype),
        grid=grid,
        in_specs=[
            pl.BlockSpec((tm, K), lambda i: (i, 0)),     # x tile
            pl.BlockSpec((K, H1), lambda i: (0, 0)),     # W1 (resident)
            pl.BlockSpec((1, H1), lambda i: (0, 0)),     # b1
            pl.BlockSpec((H1, N), lambda i: (0, 0)),     # W2 (resident)
            pl.BlockSpec((1, N), lambda i: (0, 0)),      # b2
        ],
        out_specs=pl.BlockSpec((tm, N), lambda i: (i, 0)),
        compiler_params=pltpu.CompilerParams(
            dimension_semantics=("parallel",)),
    )(xp, w1p, b1p, w2p, b2p)

    # Slice off the zero-padded output columns in the wrapper.
    return out_padded[:, :hidden_2]


if __name__ == "__main__":
    # Small shapes implied by the module: image_size=64, hidden_1=128, hidden_2=32
    B, image_size, hidden_1, hidden_2 = 16, 64, 128, 32

    key = jax.random.PRNGKey(0)
    kx, kw1, kb1, kw2, kb2 = jax.random.split(key, 5)

    x = jax.random.normal(kx, (B, image_size), dtype=jnp.float32)
    # PyTorch stores Linear weight as (out, in); we store the transpose
    # (in, out) so the kernel does x @ W directly.
    w1 = jax.random.normal(kw1, (image_size, hidden_1), dtype=jnp.float32) * 0.05
    b1 = jax.random.normal(kb1, (1, hidden_1), dtype=jnp.float32) * 0.05
    w2 = jax.random.normal(kw2, (hidden_1, hidden_2), dtype=jnp.float32) * 0.05
    b2 = jax.random.normal(kb2, (1, hidden_2), dtype=jnp.float32) * 0.05

    out = custom_model_forward(x, w1, b1, w2, b2)
    jax.block_until_ready(out)

    # Reference check in plain JAX (same math as the PyTorch forward).
    ref = (x @ w1 + b1) @ w2 + b2
    assert out.shape == (B, hidden_2)
    assert jnp.allclose(out, ref, atol=1e-4, rtol=1e-4)

    print("KERNEL_OK")
</pallas_src>

<mosaic_0001>
module attributes {stable_mosaic.version = 11 : i64} {
  func.func @mlp_kernel(%arg0: i32, %arg1: memref<16x128xf32, #tpu.memory_space<vmem>>, %arg2: memref<128x128xf32, #tpu.memory_space<vmem>>, %arg3: memref<1x128xf32, #tpu.memory_space<vmem>>, %arg4: memref<128x128xf32, #tpu.memory_space<vmem>>, %arg5: memref<1x128xf32, #tpu.memory_space<vmem>>, %arg6: memref<16x128xf32, #tpu.memory_space<vmem>>) attributes {dimension_semantics = [#tpu.dimension_semantics<parallel>], iteration_bounds = array<i64: 1>, scalar_prefetch = 0 : i64, scratch_operands = 0 : i64, tpu.core_type = #tpu.core_type<tc>, window_params = [{transform_indices = @transform_0, window_bounds = array<i64: 16, 128>}, {pipeline_mode = #tpu.pipeline_mode<synchronous>, transform_indices = @transform_1, window_bounds = array<i64: 128, 128>}, {pipeline_mode = #tpu.pipeline_mode<synchronous>, transform_indices = @transform_2, window_bounds = array<i64: 1, 128>}, {pipeline_mode = #tpu.pipeline_mode<synchronous>, transform_indices = @transform_3, window_bounds = array<i64: 128, 128>}, {pipeline_mode = #tpu.pipeline_mode<synchronous>, transform_indices = @transform_4, window_bounds = array<i64: 1, 128>}, {transform_indices = @transform_5, window_bounds = array<i64: 16, 128>}]} {
    %c0 = arith.constant 0 : index
    %c0_0 = arith.constant 0 : index
    %0 = vector.load %arg1[%c0, %c0_0] : memref<16x128xf32, #tpu.memory_space<vmem>>, vector<16x128xf32>
    %c0_1 = arith.constant 0 : index
    %c0_2 = arith.constant 0 : index
    %1 = vector.load %arg2[%c0_1, %c0_2] : memref<128x128xf32, #tpu.memory_space<vmem>>, vector<128x128xf32>
    %cst = arith.constant dense<0.000000e+00> : vector<16x128xf32>
    %2 = tpu.matmul %0, %1, %cst {dimension_numbers = #tpu.dot_dimension_numbers<[1], [0], [0], [1], [0, 0, 1, 1], [], []>} : vector<16x128xf32>, vector<128x128xf32>, vector<16x128xf32> -> vector<16x128xf32>
    %c0_3 = arith.constant 0 : index
    %c0_4 = arith.constant 0 : index
    %3 = vector.load %arg3[%c0_3, %c0_4] : memref<1x128xf32, #tpu.memory_space<vmem>>, vector<1x128xf32>
    %4 = vector.broadcast %3 : vector<1x128xf32> to vector<16x128xf32>
    %5 = arith.addf %2, %4 : vector<16x128xf32>
    %c0_5 = arith.constant 0 : index
    %c0_6 = arith.constant 0 : index
    %6 = vector.load %arg4[%c0_5, %c0_6] : memref<128x128xf32, #tpu.memory_space<vmem>>, vector<128x128xf32>
    %cst_7 = arith.constant dense<0.000000e+00> : vector<16x128xf32>
    %7 = tpu.matmul %5, %6, %cst_7 {dimension_numbers = #tpu.dot_dimension_numbers<[1], [0], [0], [1], [0, 0, 1, 1], [], []>} : vector<16x128xf32>, vector<128x128xf32>, vector<16x128xf32> -> vector<16x128xf32>
    %c0_8 = arith.constant 0 : index
    %c0_9 = arith.constant 0 : index
    %8 = vector.load %arg5[%c0_8, %c0_9] : memref<1x128xf32, #tpu.memory_space<vmem>>, vector<1x128xf32>
    %9 = vector.broadcast %8 : vector<1x128xf32> to vector<16x128xf32>
    %10 = arith.addf %7, %9 : vector<16x128xf32>
    %c0_10 = arith.constant 0 : index
    %c0_11 = arith.constant 0 : index
    %11 = vector.load %arg6[%c0_10, %c0_11] : memref<16x128xf32, #tpu.memory_space<vmem>>, vector<16x128xf32>
    tpu.vector_store %arg6[%c0_10, %c0_11], %10 {strides = array<i32>} : memref<16x128xf32, #tpu.memory_space<vmem>>, vector<16x128xf32>,
    return
  }
  func.func @transform_0(%arg0: i32) -> (i32, i32) {
    %c0_i32 = arith.constant 0 : i32
    %c0_i32_0 = arith.constant 0 : i32
    return %arg0, %c0_i32 : i32, i32
  }
  func.func @transform_1(%arg0: i32) -> (i32, i32) {
    %c0_i32 = arith.constant 0 : i32
    %c0_i32_0 = arith.constant 0 : i32
    %c0_i32_1 = arith.constant 0 : i32
    return %c0_i32, %c0_i32_0 : i32, i32
  }
  func.func @transform_2(%arg0: i32) -> (i32, i32) {
    %c0_i32 = arith.constant 0 : i32
    %c0_i32_0 = arith.constant 0 : i32
    %c0_i32_1 = arith.constant 0 : i32
    return %c0_i32, %c0_i32_0 : i32, i32
  }
  func.func @transform_3(%arg0: i32) -> (i32, i32) {
    %c0_i32 = arith.constant 0 : i32
    %c0_i32_0 = arith.constant 0 : i32
    %c0_i32_1 = arith.constant 0 : i32
    return %c0_i32, %c0_i32_0 : i32, i32
  }
  func.func @transform_4(%arg0: i32) -> (i32, i32) {
    %c0_i32 = arith.constant 0 : i32
    %c0_i32_0 = arith.constant 0 : i32
    %c0_i32_1 = arith.constant 0 : i32
    return %c0_i32, %c0_i32_0 : i32, i32
  }
  func.func @transform_5(%arg0: i32) -> (i32, i32) {
    %c0_i32 = arith.constant 0 : i32
    %c0_i32_0 = arith.constant 0 : i32
    return %arg0, %c0_i32 : i32, i32
  }
}

</mosaic_0001>

<llo_original>
// kernel: tpu_custom_call.1
$region0: #{tpu_custom_call.1}
  #allocation0 [shape = 'u32[]', space=smem, size = 0x4, offset = 0x4, fixed_abs, tag = 'smem constant byte address 0x4 - core index']
  #allocation1 [shape = 'u32[72,128]{1,0:T(1,128)}', space=vmem, size = 0x9000, scoped, tag = 'internal scratch']
  %s0 = inlined_call_operand.hbm [shape: f32[16,128], index: 0, kind: input, shape index: {}]
  %s1 = inlined_call_operand.hbm [shape: f32[128,128], index: 1, kind: input, shape index: {}]
  %s2 = inlined_call_operand.vmem [shape: f32[1,128], index: 2, kind: input, shape index: {}]
  %s3 = inlined_call_operand.hbm [shape: f32[128,128], index: 3, kind: input, shape index: {}]
  %s4 = inlined_call_operand.vmem [shape: f32[1,128], index: 4, kind: input, shape index: {}]
  %s5 = inlined_call_operand.hbm [shape: f32[16,128], index: 5, kind: output, shape index: {}]
  %s6 = sld [smem:[#allocation0]]
  $region42: #{tpu_custom_call.1} parent=0
    _
  %s8 = ssub.s32 1, %s6
  %s9 = scalar_select 0, %s8, %s6
  $region1: #{tpu_custom_call.1} parent=0
    #allocation2 [shape = 'u8[8192]{0}', space=vmem, size = 0x2000, scoped, tag = 'input window, operand 0, single buffered']
    #allocation3 [shape = 's32[1]{0}', space=sflag, size = 0x4, scoped, tag = 'scoped memory for tpu_custom_call.1']
    #allocation4 [shape = 's32[1]{0}', space=sflag, size = 0x4, scoped, tag = 'scoped memory for tpu_custom_call.1']
    #allocation5 [shape = 'u8[65536]{0}', space=vmem, size = 0x10000, scoped, tag = 'input window, operand 1, single buffered']
    #allocation6 [shape = 's32[1]{0}', space=sflag, size = 0x4, scoped, tag = 'scoped memory for tpu_custom_call.1']
    #allocation7 [shape = 'u8[65536]{0}', space=vmem, size = 0x10000, scoped, tag = 'input window, operand 3, single buffered']
    #allocation8 [shape = 'u8[8192]{0}', space=vmem, size = 0x2000, scoped, tag = 'output window, operand 0, single buffered']
    %10 = vsyncpa [#allocation3], 0
    %11 = vsyncpa [#allocation6], 0
    %12 = vsyncpa [#allocation4], 0
    // Predicated region
    $region2: #{tpu_custom_call.1} parent=1 // pred_check
      _
    $region3: #{tpu_custom_call.1} parent=1 // pred_check_branch
      %14 = sbr.rel (0) target = $region5
    $region4: #{tpu_custom_call.1} parent=1 // pred_region
      %16 = vsyncadd [#allocation3], 0
      %s17 = sshll.u32 %s0, 4
      %s18 = int_to_ptr.hbm [resolvable:$true] %s17
      %s19 = sshll.u32 [#allocation2], 4
      %s20 = int_to_ptr.vmem [resolvable:$true] %s19
      %25 = dma.hbm_to_vmem [thread:$0]  %s18, 256, %s20, [#allocation3], 128, 128, 8
    $region5: #{tpu_custom_call.1} parent=1 // pred_fallthru
      _
    // Predicated region
    $region6: #{tpu_custom_call.1} parent=1 // pred_check
      _
    $region7: #{tpu_custom_call.1} parent=1 // pred_check_branch
      %27 = sbr.rel (0) target = $region9
    $region8: #{tpu_custom_call.1} parent=1 // pred_region
      %29 = vsyncadd [#allocation6], 0
      %s30 = sshll.u32 %s1, 4
      %s31 = int_to_ptr.hbm [resolvable:$true] %s30
      %s32 = sshll.u32 [#allocation5], 4
      %s33 = int_to_ptr.vmem [resolvable:$true] %s32
      %38 = dma.hbm_to_vmem [thread:$0]  %s31, 2048, %s33, [#allocation6], 128, 128, 8
    $region9: #{tpu_custom_call.1} parent=1 // pred_fallthru
      _
    // Predicated region
    $region10: #{tpu_custom_call.1} parent=1 // pred_check
      _
    $region11: #{tpu_custom_call.1} parent=1 // pred_check_branch
      %40 = sbr.rel (0) target = $region13
    $region12: #{tpu_custom_call.1} parent=1 // pred_region
      _
    $region13: #{tpu_custom_call.1} parent=1 // pred_fallthru
      _
    // Predicated region
    $region14: #{tpu_custom_call.1} parent=1 // pred_check
      _
    $region15: #{tpu_custom_call.1} parent=1 // pred_check_branch
      %42 = sbr.rel (0) target = $region17
    $region16: #{tpu_custom_call.1} parent=1 // pred_region
      %44 = vsyncadd [#allocation6], 0
      %s45 = sshll.u32 %s3, 4
      %s46 = int_to_ptr.hbm [resolvable:$true] %s45
      %s47 = sshll.u32 [#allocation7], 4
      %s48 = int_to_ptr.vmem [resolvable:$true] %s47
      %53 = dma.hbm_to_vmem [thread:$0]  %s46, 2048, %s48, [#allocation6], 128, 128, 8
    $region17: #{tpu_custom_call.1} parent=1 // pred_fallthru
      _
    // Predicated region
    $region18: #{tpu_custom_call.1} parent=1 // pred_check
      _
    $region19: #{tpu_custom_call.1} parent=1 // pred_check_branch
      %55 = sbr.rel (0) target = $region21
    $region20: #{tpu_custom_call.1} parent=1 // pred_region
      _
    $region21: #{tpu_custom_call.1} parent=1 // pred_fallthru
      _
    // Predicated region
    $region22: #{tpu_custom_call.1} parent=1 // pred_check
      _
    $region23: #{tpu_custom_call.1} parent=1 // pred_check_branch
      %57 = sbr.rel (0) target = $region25
    $region24: #{tpu_custom_call.1} parent=1 // pred_region
      %59 = dma.done [#allocation3], 256
    $region25: #{tpu_custom_call.1} parent=1 // pred_fallthru
      _
    // Predicated region
    $region26: #{tpu_custom_call.1} parent=1 // pred_check
      _
    $region27: #{tpu_custom_call.1} parent=1 // pred_check_branch
      %61 = sbr.rel (0) target = $region29
    $region28: #{tpu_custom_call.1} parent=1 // pred_region
      %63 = dma.done [#allocation6], 2048
    $region29: #{tpu_custom_call.1} parent=1 // pred_fallthru
      _
    // Predicated region
    $region30: #{tpu_custom_call.1} parent=1 // pred_check
      _
    $region31: #{tpu_custom_call.1} parent=1 // pred_check_branch
      %65 = sbr.rel (0) target = $region33
    $region32: #{tpu_custom_call.1} parent=1 // pred_region
      %67 = dma.done [#allocation6], 2048
    $region33: #{tpu_custom_call.1} parent=1 // pred_fallthru
      _
    %v68 = vld [vmem:[#allocation2] sm:$0xff]
    %v69 = vld [vmem:[#allocation2 + $0x8] sm:$0xff]
    %v70 = vld [vmem:[#allocation5] sm:$0xff]
    %v71 = vld [vmem:[#allocation5 + $0x8] sm:$0xff]
    %v72 = vld [vmem:[#allocation5 + $0x10] sm:$0xff]
    %v73 = vld [vmem:[#allocation5 + $0x18] sm:$0xff]
    %v74 = vld [vmem:[#allocation5 + $0x20] sm:$0xff]
    %v75 = vld [vmem:[#allocation5 + $0x28] sm:$0xff]
    %v76 = vld [vmem:[#allocation5 + $0x30] sm:$0xff]
    %v77 = vld [vmem:[#allocation5 + $0x38] sm:$0xff]
    %v78 = vld [vmem:[#allocation5 + $0x40] sm:$0xff]
    %v79 = vld [vmem:[#allocation5 + $0x48] sm:$0xff]
    %v80 = vld [vmem:[#allocation5 + $0x50] sm:$0xff]
    %v81 = vld [vmem:[#allocation5 + $0x58] sm:$0xff]
    %v82 = vld [vmem:[#allocation5 + $0x60] sm:$0xff]
    %v83 = vld [vmem:[#allocation5 + $0x68] sm:$0xff]
    %v84 = vld [vmem:[#allocation5 + $0x70] sm:$0xff]
    %v85 = vld [vmem:[#allocation5 + $0x78] sm:$0xff]
    %v86 = vld [vmem:[%s2] sm:$0x1]
    %v88 = vperm.slane %v86, 0
    %90 = vmatpush.msra.mxu0 %v85
    %91 = vmatpush.msra.mxu0 %v84
    %92 = vmatpush.msra.mxu0 %v83
    %93 = vmatpush.msra.mxu0 %v82
    %94 = vmatpush.msra.mxu0 %v81
    %95 = vmatpush.msra.mxu0 %v80
    %96 = vmatpush.msra.mxu0 %v79
    %97 = vmatpush.msra.mxu0 %v78
    %98 = vmatpush.msra.mxu0 %v77
    %99 = vmatpush.msra.mxu0 %v76
    %100 = vmatpush.msra.mxu0 %v75
    %101 = vmatpush.msra.mxu0 %v74
    %102 = vmatpush.msra.mxu0 %v73
    %103 = vmatpush.msra.mxu0 %v72
    %104 = vmatpush.msra.mxu0 %v71
    %105 = vmatpush.msra.mxu0 %v70
    %106 = vmatmul.f32.gmra.mxu0 %v68
    %v107 = vpop.f32.mrf.mxu0
    %v108 = vadd.f32 %v88, %v107
    %109 = vmatmul.f32.gmra.mxu0 %v69
    %v110 = vpop.f32.mrf.mxu0
    %v111 = vadd.f32 %v88, %v110
    %112 = vdwg.mxu0
    %v113 = vld [vmem:[#allocation7] sm:$0xff]
    %v114 = vld [vmem:[#allocation7 + $0x8] sm:$0xff]
    %v115 = vld [vmem:[#allocation7 + $0x10] sm:$0xff]
    %v116 = vld [vmem:[#allocation7 + $0x18] sm:$0xff]
    %v117 = vld [vmem:[#allocation7 + $0x20] sm:$0xff]
    %v118 = vld [vmem:[#allocation7 + $0x28] sm:$0xff]
    %v119 = vld [vmem:[#allocation7 + $0x30] sm:$0xff]
    %v120 = vld [vmem:[#allocation7 + $0x38] sm:$0xff]
    %v121 = vld [vmem:[#allocation7 + $0x40] sm:$0xff]
    %v122 = vld [vmem:[#allocation7 + $0x48] sm:$0xff]
    %v123 = vld [vmem:[#allocation7 + $0x50] sm:$0xff]
    %v124 = vld [vmem:[#allocation7 + $0x58] sm:$0xff]
    %v125 = vld [vmem:[#allocation7 + $0x60] sm:$0xff]
    %v126 = vld [vmem:[#allocation7 + $0x68] sm:$0xff]
    %v127 = vld [vmem:[#allocation7 + $0x70] sm:$0xff]
    %v128 = vld [vmem:[#allocation7 + $0x78] sm:$0xff]
    %v129 = vld [vmem:[%s4] sm:$0x1]
    %v131 = vperm.slane %v129, 0
    %133 = vmatpush.msra.mxu0 %v128
    %134 = vmatpush.msra.mxu0 %v127
    %135 = vmatpush.msra.mxu0 %v126
    %136 = vmatpush.msra.mxu0 %v125
    %137 = vmatpush.msra.mxu0 %v124
    %138 = vmatpush.msra.mxu0 %v123
    %139 = vmatpush.msra.mxu0 %v122
    %140 = vmatpush.msra.mxu0 %v121
    %141 = vmatpush.msra.mxu0 %v120
    %142 = vmatpush.msra.mxu0 %v119
    %143 = vmatpush.msra.mxu0 %v118
    %144 = vmatpush.msra.mxu0 %v117
    %145 = vmatpush.msra.mxu0 %v116
    %146 = vmatpush.msra.mxu0 %v115
    %147 = vmatpush.msra.mxu0 %v114
    %148 = vmatpush.msra.mxu0 %v113
    %149 = vmatmul.f32.gmra.mxu0 %v108
    %v150 = vpop.f32.mrf.mxu0
    %v151 = vadd.f32 %v131, %v150
    %152 = vmatmul.f32.gmra.mxu0 %v111
    %v153 = vpop.f32.mrf.mxu0
    %v154 = vadd.f32 %v131, %v153
    %155 = vdwg.mxu0
    %156 = vst [vmem:[#allocation8] sm:$0xff] %v151
    %157 = vst [vmem:[#allocation8 + $0x8] sm:$0xff] %v154
    // Predicated region
    $region34: #{tpu_custom_call.1} parent=1 // pred_check
      _
    $region35: #{tpu_custom_call.1} parent=1 // pred_check_branch
      %159 = sbr.rel (0) target = $region37
    $region36: #{tpu_custom_call.1} parent=1 // pred_region
      %161 = vsyncadd [#allocation4], 0
      %s162 = sshll.u32 [#allocation8], 4
      %s163 = int_to_ptr.vmem [resolvable:$true] %s162
      %s164 = sshll.u32 %s5, 4
      %s165 = int_to_ptr.hbm [resolvable:$true] %s164
      %170 = dma.vmem_to_hbm [thread:$0]  %s163, 256, %s165, [#allocation4], 128, 128, 8
    $region37: #{tpu_custom_call.1} parent=1 // pred_fallthru
      _
    // Predicated region
    $region38: #{tpu_custom_call.1} parent=1 // pred_check
      _
    $region39: #{tpu_custom_call.1} parent=1 // pred_check_branch
      %172 = sbr.rel (0) target = $region41
    $region40: #{tpu_custom_call.1} parent=1 // pred_region
      %174 = dma.done [#allocation4], 256
    $region41: #{tpu_custom_call.1} parent=1 // pred_fallthru
      _
    %175 = vsyncpa [#allocation3], 1
    %176 = vsyncpa [#allocation6], 1
    %177 = vsyncpa [#allocation4], 1

</llo_original>
